<compile_context>
chip_gen: v7x
topology: tpu7x:2x2x1
jax: 0.10.0
libtpu: 0.0.40
codegen_flags: <defaults>
</compile_context>

<pallas_src>
import functools

import jax
import jax.numpy as jnp
from jax import lax
from jax.experimental import pallas as pl
from jax.experimental.pallas import tpu as pltpu

_LANE = 128
_REDUCE_CHUNK = 512  # lane chunk for the streamed spatial reduction


def _vmem_capacity_bytes():
    """Physical VMEM per TensorCore; falls back to the smallest (v7x, 64 MiB)."""
    try:
        info = pltpu.get_tpu_info()
        cap = int(getattr(info, "vmem_capacity_bytes", 0) or 0)
        if cap > 0:
            return cap
    except Exception:
        pass
    return 64 << 20


def _spatial_sum_f32(x_ref, hw):
    """f32 sum of x_ref (TB, C, HW) over the lane (HW) axis, streamed in lane
    chunks so the live vreg set stays bounded on multi-MiB blocks."""
    tb, c = x_ref.shape[0], x_ref.shape[1]
    if hw <= 2 * _REDUCE_CHUNK:
        return jnp.sum(x_ref[...].astype(jnp.float32), axis=-1)

    n_full = hw // _REDUCE_CHUNK

    def body(i, acc):
        start = pl.multiple_of(i * _REDUCE_CHUNK, _REDUCE_CHUNK)
        blk = x_ref[:, :, pl.ds(start, _REDUCE_CHUNK)].astype(jnp.float32)
        return acc + jnp.sum(blk, axis=-1)

    acc = lax.fori_loop(0, n_full, body, jnp.zeros((tb, c), jnp.float32))
    rem = hw - n_full * _REDUCE_CHUNK
    if rem:
        tail = x_ref[:, :, pl.ds(n_full * _REDUCE_CHUNK, rem)].astype(jnp.float32)
        acc = acc + jnp.sum(tail, axis=-1)
    return acc


def _excite(pooled_sum, w1_ref, w2_ref):
    """FC -> ReLU -> FC -> sigmoid.  1/HW is pre-folded into W1."""
    h = jnp.dot(pooled_sum, w1_ref[...], preferred_element_type=jnp.float32)
    h = jnp.maximum(h, 0.0)
    s = jnp.dot(h, w2_ref[...], preferred_element_type=jnp.float32)
    return jax.nn.sigmoid(s)


# ---------------------------------------------------------------------------
# Fused single-pass kernel: one (TB, C, HW) slab per grid step.
# ---------------------------------------------------------------------------
def _se_fused_kernel(x_ref, w1_ref, w2_ref, o_ref, *, hw):
    pooled = _spatial_sum_f32(x_ref, hw)              # (TB, C)  f32
    s = _excite(pooled, w1_ref, w2_ref)               # (TB, C)  f32
    gate = s.astype(x_ref.dtype)
    o_ref[...] = x_ref[...] * gate[:, :, None]


# ---------------------------------------------------------------------------
# Two-pass fallback: pass 1 = pooled sum -> gates, pass 2 = lane-dense scale.
# ---------------------------------------------------------------------------
def _se_gate_kernel(x_ref, w1_ref, w2_ref, s_ref, acc_ref, *, hw, hwc):
    k = pl.program_id(1)

    @pl.when(k == 0)
    def _():
        acc_ref[...] = jnp.zeros_like(acc_ref)

    xf = x_ref[...].astype(jnp.float32)               # (1, C, HWC)
    if hw % hwc != 0:
        # Only the HW tail chunk is ragged: mask padded lanes out of the sum.
        lane = lax.broadcasted_iota(jnp.int32, xf.shape, 2) + k * hwc
        xf = jnp.where(lane < hw, xf, 0.0)
    acc_ref[...] += jnp.sum(xf, axis=-1)              # (1, C)

    @pl.when(k == pl.num_programs(1) - 1)
    def _():
        s = _excite(acc_ref[...], w1_ref, w2_ref)     # (1, C)
        s_ref[...] = s[:, :, None].astype(s_ref.dtype)


def _se_scale_kernel(x_ref, s_ref, o_ref):
    gate = s_ref[...].astype(x_ref.dtype)             # (1, C, 1)
    o_ref[...] = x_ref[...] * gate


# ---------------------------------------------------------------------------
# Wrapper
# ---------------------------------------------------------------------------
def se_layer(x, w1, w2, *, block_budget_bytes=None):
    """x: (B, C, H, W); w1: (C, C//r); w2: (C//r, C)."""
    B, C, H, W = x.shape
    HW = H * W
    Cr = w1.shape[1]
    itemsize = jnp.dtype(x.dtype).itemsize

    # --- generation-aware budgets -----------------------------------------
    cap = _vmem_capacity_bytes()
    if block_budget_bytes is None:
        # ~14 MiB blocks on 128-MiB-VMEM parts (v5e/v6e), ~9 MiB on v7x.
        block_budget_bytes = (14 << 20) if cap >= (100 << 20) else (9 << 20)
    vmem_cap = min(int(cap * 3 // 4), 96 << 20)

    # --- weight prep (tiny, one-off): fold 1/HW into W1, pad C/r to >=8 ----
    inv_hw = 1.0 / float(HW)
    crp = max(8, pl.cdiv(Cr, 8) * 8)
    w1p = w1.astype(jnp.float32) * inv_hw
    w2p = w2.astype(jnp.float32)
    if crp != Cr:
        w1p = jnp.pad(w1p, ((0, 0), (0, crp - Cr)))
        w2p = jnp.pad(w2p, ((0, crp - Cr), (0, 0)))
    weight_bytes = (w1p.size + w2p.size) * 4

    x_flat = x.reshape(B, C, HW)          # trailing-dim merge: no HBM copy
    per_image_bytes = C * HW * itemsize

    cost = pl.CostEstimate(
        flops=int(3 * B * C * HW + 4 * B * C * crp),
        transcendentals=int(B * C),
        bytes_accessed=int(2 * B * C * HW * itemsize + 2 * weight_bytes),
    )

    if per_image_bytes <= block_budget_bytes:
        # ----------------- fused single-pass path -------------------------
        tb = max(1, min(B, block_budget_bytes // per_image_bytes))
        if B > 1:
            # Keep >= min(B, 4) grid steps so dual-core parts get >=2
            # pipelined steps per TensorCore.
            tb = min(tb, max(1, pl.cdiv(B, min(B, 4))))
        n_steps = pl.cdiv(B, tb)

        block_bytes = tb * per_image_bytes
        need = 4 * block_bytes + weight_bytes + (2 << 20)
        vmem_limit = int(max(min(max(need, 16 << 20), vmem_cap), need))

        out_flat = pl.pallas_call(
            functools.partial(_se_fused_kernel, hw=HW),
            out_shape=jax.ShapeDtypeStruct((B, C, HW), x.dtype),
            grid_spec=pltpu.PrefetchScalarGridSpec(
                num_scalar_prefetch=0,
                grid=(n_steps,),
                in_specs=[
                    pl.BlockSpec((tb, C, HW), lambda b: (b, 0, 0)),  # x slab
                    pl.BlockSpec((C, crp), lambda b: (0, 0)),        # W1 resident
                    pl.BlockSpec((crp, C), lambda b: (0, 0)),        # W2 resident
                ],
                out_specs=pl.BlockSpec((tb, C, HW), lambda b: (b, 0, 0)),
            ),
            compiler_params=pltpu.CompilerParams(
                dimension_semantics=("parallel",),
                vmem_limit_bytes=vmem_limit,
            ),
            cost_estimate=cost,
        )(x_flat, w1p, w2p)
        return out_flat.reshape(B, C, H, W)

    # --------------- two-pass fallback (large single-image slabs) ---------
    chunk_budget = max(block_budget_bytes // 2, C * _LANE * itemsize)
    hwc = max(_LANE, (chunk_budget // (C * itemsize)) // _LANE * _LANE)
    hwc = min(hwc, pl.cdiv(HW, _LANE) * _LANE)
    n_hw = pl.cdiv(HW, hwc)

    block_bytes = C * hwc * itemsize
    need = 5 * block_bytes + weight_bytes + (2 << 20)
    vmem_limit = int(max(min(max(need, 16 << 20), vmem_cap), need))

    # Pass 1: pooled sums -> gates (B, C, 1), f32.
    gates = pl.pallas_call(
        functools.partial(_se_gate_kernel, hw=HW, hwc=hwc),
        out_shape=jax.ShapeDtypeStruct((B, C, 1), jnp.float32),
        grid_spec=pltpu.PrefetchScalarGridSpec(
            num_scalar_prefetch=0,
            grid=(B, n_hw),
            in_specs=[
                pl.BlockSpec((1, C, hwc), lambda b, k: (b, 0, k)),
                pl.BlockSpec((C, crp), lambda b, k: (0, 0)),
                pl.BlockSpec((crp, C), lambda b, k: (0, 0)),
            ],
            out_specs=pl.BlockSpec((1, C, 1), lambda b, k: (b, 0, 0)),
            scratch_shapes=[pltpu.VMEM((1, C), jnp.float32)],
        ),
        compiler_params=pltpu.CompilerParams(
            dimension_semantics=("parallel", "arbitrary"),
            vmem_limit_bytes=vmem_limit,
        ),
    )(x_flat, w1p, w2p)

    # Pass 2: lane-dense scale.
    out_flat = pl.pallas_call(
        _se_scale_kernel,
        out_shape=jax.ShapeDtypeStruct((B, C, HW), x.dtype),
        grid_spec=pltpu.PrefetchScalarGridSpec(
            num_scalar_prefetch=0,
            grid=(B, n_hw),
            in_specs=[
                pl.BlockSpec((1, C, hwc), lambda b, k: (b, 0, k)),
                pl.BlockSpec((1, C, 1), lambda b, k: (b, 0, 0)),
            ],
            out_specs=pl.BlockSpec((1, C, hwc), lambda b, k: (b, 0, k)),
        ),
        compiler_params=pltpu.CompilerParams(
            dimension_semantics=("parallel", "parallel"),
            vmem_limit_bytes=vmem_limit,
        ),
        cost_estimate=cost,
    )(x_flat, gates)
    return out_flat.reshape(B, C, H, W)


def se_layer_ref(x, w1, w2):
    """Pure-JAX reference of the PyTorch forward."""
    pooled = jnp.mean(x, axis=(2, 3))                 # (B, C)
    h = jnp.maximum(pooled @ w1, 0.0)                 # (B, C//r)
    s = jax.nn.sigmoid(h @ w2)                        # (B, C)
    return x * s[:, :, None, None]


if __name__ == "__main__":
    def check(B, C, H, W, reduction, **kw):
        Cr = max(1, C // reduction)
        key = jax.random.PRNGKey(0)
        kx, k1, k2 = jax.random.split(key, 3)
        x = jax.random.normal(kx, (B, C, H, W), dtype=jnp.float32)
        w1 = jax.random.uniform(k1, (C, Cr), jnp.float32,
                                minval=-1.0, maxval=1.0) / jnp.sqrt(C)
        w2 = jax.random.uniform(k2, (Cr, C), jnp.float32,
                                minval=-1.0, maxval=1.0) / jnp.sqrt(Cr)
        out = jax.block_until_ready(se_layer(x, w1, w2, **kw))
        ref = se_layer_ref(x, w1, w2)
        assert out.shape == (B, C, H, W)
        assert jnp.allclose(out, ref, atol=1e-5, rtol=1e-5), \
            f"mismatch vs reference for shape {(B, C, H, W)}"

    # 1) fused path, small slab (the module's nominal shapes).
    check(2, 32, 16, 16, 16)
    # 2) fused path: streamed spatial reduce + ragged final batch block.
    check(5, 32, 40, 40, 16)
    # 3) forced two-pass (reduce-then-scale) fallback with ragged HW tail.
    check(2, 32, 40, 40, 16, block_budget_bytes=128 * 1024)

    print("KERNEL_OK")
</pallas_src>

<mosaic_0001>
module attributes {stable_mosaic.version = 11 : i64} {
  func.func @_se_fused_kernel(%arg0: i32, %arg1: memref<1x32x256xf32, #tpu.memory_space<vmem>>, %arg2: memref<32x8xf32, #tpu.memory_space<vmem>>, %arg3: memref<8x32xf32, #tpu.memory_space<vmem>>, %arg4: memref<1x32x256xf32, #tpu.memory_space<vmem>>) attributes {dimension_semantics = [#tpu.dimension_semantics<parallel>], iteration_bounds = array<i64: 2>, scalar_prefetch = 0 : i64, scratch_operands = 0 : i64, tpu.core_type = #tpu.core_type<tc>, window_params = [{transform_indices = @transform_0, window_bounds = array<i64: 1, 32, 256>}, {pipeline_mode = #tpu.pipeline_mode<synchronous>, transform_indices = @transform_1, window_bounds = array<i64: 32, 8>}, {pipeline_mode = #tpu.pipeline_mode<synchronous>, transform_indices = @transform_2, window_bounds = array<i64: 8, 32>}, {transform_indices = @transform_3, window_bounds = array<i64: 1, 32, 256>}]} {
    %c0 = arith.constant 0 : index
    %c0_0 = arith.constant 0 : index
    %c0_1 = arith.constant 0 : index
    %0 = vector.load %arg1[%c0, %c0_0, %c0_1] : memref<1x32x256xf32, #tpu.memory_space<vmem>>, vector<1x32x256xf32>
    %cst = arith.constant dense<0.000000e+00> : vector<1x32xf32>
    %1 = vector.multi_reduction <add>, %0, %cst [2] : vector<1x32x256xf32> to vector<1x32xf32>
    %c0_2 = arith.constant 0 : index
    %c0_3 = arith.constant 0 : index
    %2 = vector.load %arg2[%c0_2, %c0_3] : memref<32x8xf32, #tpu.memory_space<vmem>>, vector<32x8xf32>
    %cst_4 = arith.constant dense<0.000000e+00> : vector<1x8xf32>
    %3 = tpu.matmul %1, %2, %cst_4 {dimension_numbers = #tpu.dot_dimension_numbers<[1], [0], [0], [1], [0, 0, 1, 1], [], []>} : vector<1x32xf32>, vector<32x8xf32>, vector<1x8xf32> -> vector<1x8xf32>
    %cst_5 = arith.constant 0.000000e+00 : f32
    %4 = vector.broadcast %cst_5 : f32 to vector<1x8xf32>
    %5 = arith.maximumf %3, %4 : vector<1x8xf32>
    %c0_6 = arith.constant 0 : index
    %c0_7 = arith.constant 0 : index
    %6 = vector.load %arg3[%c0_6, %c0_7] : memref<8x32xf32, #tpu.memory_space<vmem>>, vector<8x32xf32>
    %cst_8 = arith.constant dense<0.000000e+00> : vector<1x32xf32>
    %7 = tpu.matmul %5, %6, %cst_8 {dimension_numbers = #tpu.dot_dimension_numbers<[1], [0], [0], [1], [0, 0, 1, 1], [], []>} : vector<1x8xf32>, vector<8x32xf32>, vector<1x32xf32> -> vector<1x32xf32>
    %8 = arith.negf %7 : vector<1x32xf32>
    %9 = math.exp %8 : vector<1x32xf32>
    %cst_9 = arith.constant 1.000000e+00 : f32
    %10 = vector.broadcast %cst_9 : f32 to vector<1x32xf32>
    %11 = arith.addf %10, %9 : vector<1x32xf32>
    %12 = arith.divf %10, %11 : vector<1x32xf32>
    %c0_10 = arith.constant 0 : index
    %c0_11 = arith.constant 0 : index
    %c0_12 = arith.constant 0 : index
    %13 = vector.load %arg1[%c0_10, %c0_11, %c0_12] : memref<1x32x256xf32, #tpu.memory_space<vmem>>, vector<1x32x256xf32>
    %14 = vector.shape_cast %12 : vector<1x32xf32> to vector<1x32x1xf32>
    %15 = vector.broadcast %14 : vector<1x32x1xf32> to vector<1x32x256xf32>
    %16 = arith.mulf %13, %15 : vector<1x32x256xf32>
    %c0_13 = arith.constant 0 : index
    %c0_14 = arith.constant 0 : index
    %c0_15 = arith.constant 0 : index
    %17 = vector.load %arg4[%c0_13, %c0_14, %c0_15] : memref<1x32x256xf32, #tpu.memory_space<vmem>>, vector<1x32x256xf32>
    tpu.vector_store %arg4[%c0_13, %c0_14, %c0_15], %16 {strides = array<i32>} : memref<1x32x256xf32, #tpu.memory_space<vmem>>, vector<1x32x256xf32>,
    return
  }
  func.func @transform_0(%arg0: i32) -> (i32, i32, i32) {
    %c0_i32 = arith.constant 0 : i32
    %c0_i32_0 = arith.constant 0 : i32
    %c0_i32_1 = arith.constant 0 : i32
    return %arg0, %c0_i32, %c0_i32_0 : i32, i32, i32
  }
  func.func @transform_1(%arg0: i32) -> (i32, i32) {
    %c0_i32 = arith.constant 0 : i32
    %c0_i32_0 = arith.constant 0 : i32
    %c0_i32_1 = arith.constant 0 : i32
    return %c0_i32, %c0_i32_0 : i32, i32
  }
  func.func @transform_2(%arg0: i32) -> (i32, i32) {
    %c0_i32 = arith.constant 0 : i32
    %c0_i32_0 = arith.constant 0 : i32
    %c0_i32_1 = arith.constant 0 : i32
    return %c0_i32, %c0_i32_0 : i32, i32
  }
  func.func @transform_3(%arg0: i32) -> (i32, i32, i32) {
    %c0_i32 = arith.constant 0 : i32
    %c0_i32_0 = arith.constant 0 : i32
    %c0_i32_1 = arith.constant 0 : i32
    return %arg0, %c0_i32, %c0_i32_0 : i32, i32, i32
  }
}

</mosaic_0001>

<llo_original>
// kernel: tpu_custom_call.1
$region0: #{tpu_custom_call.1}
  #allocation0 [shape = 'u32[]', space=smem, size = 0x4, offset = 0x4, fixed_abs, tag = 'smem constant byte address 0x4 - core index']
  #allocation1 [shape = 'u32[144,128]{1,0:T(1,128)}', space=vmem, size = 0x12000, scoped, tag = 'internal scratch']
  %s0 = inlined_call_operand.hbm [shape: f32[2,32,256], index: 0, kind: input, shape index: {}]
  %s1 = inlined_call_operand.vmem [shape: f32[32,8], index: 1, kind: input, shape index: {}]
  %s2 = inlined_call_operand.vmem [shape: f32[8,32], index: 2, kind: input, shape index: {}]
  %s3 = inlined_call_operand.hbm [shape: f32[2,32,256], index: 3, kind: output, shape index: {}]
  %s4 = sld [smem:[#allocation0]]
  $region49: #{tpu_custom_call.1} parent=0
    _
  %s6 = ssub.s32 1, %s4
  %s7 = scalar_select 0, %s6, %s4
  $region1: #{tpu_custom_call.1} parent=0
    #allocation2 [shape = 'u8[65536]{0}', space=vmem, size = 0x10000, scoped, tag = 'input window, operand 0']
    #allocation3 [shape = 's32[2]{0}', space=sflag, size = 0x8, scoped, tag = 'scoped memory for tpu_custom_call.1']
    #allocation4 [shape = 's32[2]{0}', space=sflag, size = 0x8, scoped, tag = 'scoped memory for tpu_custom_call.1']
    #allocation5 [shape = 'u8[65536]{0}', space=vmem, size = 0x10000, scoped, tag = 'output window, operand 0']
    %8 = vsyncpa [#allocation3], 0
    %s9 = scalar_lea.sflag [#allocation3], 1
    %10 = vsyncpa %s9, 0
    %11 = vsyncpa [#allocation4], 0
    %s12 = scalar_lea.sflag [#allocation4], 1
    %13 = vsyncpa %s12, 0
    loop: start=0, step=1, limit=4
    $region2: #{tpu_custom_call.1} parent=1 // loop_pre_header
      _
    $region3: #{tpu_custom_call.1} parent=1 // loop_header
      %s15 = sphi 0, %s19
      %p16 = scmp.ge.s32.totalorder %s15, 4
      %s25 = sphi 0, %s27
      %s28 = sphi 0, %s25
      %s29 = sphi 0, %s28
      %s45 = sphi 0, %s29
      %s49 = sphi 0, %s49
      %s51 = sphi 0, %s49
      %s52 = sphi 0, %s51
      %s66 = sphi 0, %s52
      %s70 = sphi 0, %s70
      %s72 = sphi 0, %s70
      %s73 = sphi 0, %s72
      %s87 = sphi 0, %s73
      %s93 = sphi 0, %s95
      %s96 = sphi 0, %s93
      %s97 = sphi 0, %s96
      %s113 = sphi 0, %s97
    $region4: #{tpu_custom_call.1} parent=1 // loop_header_branch
      %18 = sbr.rel (%p16) target = $region8
    $region5: #{tpu_custom_call.1} parent=1 // loop_body
      %s20 = ssub.s32 %s15, 1
      %s21 = ssub.s32 %s15, 2
      %s22 = sadd.s32 %s15, 1
      %s23 = ssub.s32 %s15, %s22
      %p24 = scmp.eq.s32.totalorder %s23, 0
      %s26 = sadd.s32 %s25, 1
      %s27 = scalar_select %p24, %s25, %s26
      %p30 = pneg %p24
      %p31 = scmp.eq.s32.totalorder %s15, 1
      %p32 = por %p30, %p31
      %p33 = scmp.ne.s32.totalorder %s25, %s28
      %p34 = scmp.eq.s32.totalorder %s15, 0
      %p35 = por %p33, %p34
      %p36 = scmp.ne.s32.totalorder %s25, %s28
      %p37 = scmp.eq.s32.totalorder %s20, 1
      %p38 = por %p36, %p37
      %p39 = scmp.ne.s32.totalorder %s28, %s29
      %p40 = scmp.eq.s32.totalorder %s20, 0
      %p41 = por %p39, %p40
      %p42 = scmp.ne.s32.totalorder %s28, %s29
      %p43 = scmp.eq.s32.totalorder %s21, 1
      %p44 = por %p42, %p43
      %p46 = scmp.ne.s32.totalorder %s29, %s45
      %p47 = scmp.eq.s32.totalorder %s21, 0
      %p48 = por %p46, %p47
      %s50 = sadd.s32 %s49, 1
      %p53 = scmp.eq.s32.totalorder %s15, 1
      %p54 = scmp.ne.s32.totalorder %s49, %s51
      %p55 = scmp.eq.s32.totalorder %s15, 0
      %p56 = por %p54, %p55
      %p57 = scmp.ne.s32.totalorder %s49, %s51
      %p58 = scmp.eq.s32.totalorder %s20, 1
      %p59 = por %p57, %p58
      %p60 = scmp.ne.s32.totalorder %s51, %s52
      %p61 = scmp.eq.s32.totalorder %s20, 0
      %p62 = por %p60, %p61
      %p63 = scmp.ne.s32.totalorder %s51, %s52
      %p64 = scmp.eq.s32.totalorder %s21, 1
      %p65 = por %p63, %p64
      %p67 = scmp.ne.s32.totalorder %s52, %s66
      %p68 = scmp.eq.s32.totalorder %s21, 0
      %p69 = por %p67, %p68
      %s71 = sadd.s32 %s70, 1
      %p74 = scmp.eq.s32.totalorder %s15, 1
      %p75 = scmp.ne.s32.totalorder %s70, %s72
      %p76 = scmp.eq.s32.totalorder %s15, 0
      %p77 = por %p75, %p76
      %p78 = scmp.ne.s32.totalorder %s70, %s72
      %p79 = scmp.eq.s32.totalorder %s20, 1
      %p80 = por %p78, %p79
      %p81 = scmp.ne.s32.totalorder %s72, %s73
      %p82 = scmp.eq.s32.totalorder %s20, 0
      %p83 = por %p81, %p82
      %p84 = scmp.ne.s32.totalorder %s72, %s73
      %p85 = scmp.eq.s32.totalorder %s21, 1
      %p86 = por %p84, %p85
      %p88 = scmp.ne.s32.totalorder %s73, %s87
      %p89 = scmp.eq.s32.totalorder %s21, 0
      %p90 = por %p88, %p89
      %s91 = ssub.s32 %s15, %s22
      %p92 = scmp.eq.s32.totalorder %s91, 0
      %s94 = sadd.s32 %s93, 1
      %s95 = scalar_select %p92, %s93, %s94
      %p98 = pneg %p92
      %p99 = scmp.eq.s32.totalorder %s15, 1
      %p100 = por %p98, %p99
      %p101 = scmp.ne.s32.totalorder %s93, %s96
      %p102 = scmp.eq.s32.totalorder %s15, 0
      %p103 = por %p101, %p102
      %p104 = scmp.ne.s32.totalorder %s93, %s96
      %p105 = scmp.eq.s32.totalorder %s20, 1
      %p106 = por %p104, %p105
      %p107 = scmp.ne.s32.totalorder %s96, %s97
      %p108 = scmp.eq.s32.totalorder %s20, 0
      %p109 = por %p107, %p108
      %p110 = scmp.ne.s32.totalorder %s96, %s97
      %p111 = scmp.eq.s32.totalorder %s21, 1
      %p112 = por %p110, %p111
      %p114 = scmp.ne.s32.totalorder %s97, %s113
      %p115 = scmp.eq.s32.totalorder %s21, 0
      %p116 = por %p114, %p115
      %p117 = scmp.le.s32.totalorder 1, %s15
      %p118 = scmp.lt.s32.totalorder %s15, 3
      %p119 = pnand %p117, %p118
      %p120 = pneg %p119
      // Predicated region
      $region9: #{tpu_custom_call.1} parent=5 // pred_check
        _
      $region10: #{tpu_custom_call.1} parent=5 // pred_check_branch
        %122 = sbr.rel (%p119) target = $region12
      $region11: #{tpu_custom_call.1} parent=5 // pred_region
        %s123 = ssub.s32 %s15, 1
        // Predicated region
        $region13: #{tpu_custom_call.1} parent=11 // pred_check
          %p124 = pneg %p62
        $region14: #{tpu_custom_call.1} parent=11 // pred_check_branch
          %126 = sbr.rel (%p124) target = $region16
        $region15: #{tpu_custom_call.1} parent=11 // pred_region
          _
        $region16: #{tpu_custom_call.1} parent=11 // pred_fallthru
          _
        // Predicated region
        $region17: #{tpu_custom_call.1} parent=11 // pred_check
          %p127 = pneg %p83
        $region18: #{tpu_custom_call.1} parent=11 // pred_check_branch
          %129 = sbr.rel (%p127) target = $region20
        $region19: #{tpu_custom_call.1} parent=11 // pred_region
          _
        $region20: #{tpu_custom_call.1} parent=11 // pred_fallthru
          _
      $region12: #{tpu_custom_call.1} parent=5 // pred_fallthru
        _
      %p130 = scmp.lt.s32.totalorder %s15, 2
      // Predicated region
      $region21: #{tpu_custom_call.1} parent=5 // pred_check
        %p131 = pneg %p130
      $region22: #{tpu_custom_call.1} parent=5 // pred_check_branch
        %133 = sbr.rel (%p131) target = $region24
      $region23: #{tpu_custom_call.1} parent=5 // pred_region
        // Predicated region
        $region25: #{tpu_custom_call.1} parent=23 // pred_check
          %p134 = pneg %p35
        $region26: #{tpu_custom_call.1} parent=23 // pred_check_branch
          %136 = sbr.rel (%p134) target = $region28
        $region27: #{tpu_custom_call.1} parent=23 // pred_region
          %s137 = sand.u32 %s25, 1
          %s138 = scalar_lea.sflag [#allocation3], %s137
          %s139 = sand.u32 %s25, 1
          %s140 = smul.addr %s139, 64
          %s141 = scalar_lea.vmem [#allocation2], %s140
          %s143 = ssub.s32 1024, 1024
          %144 = vsyncadd %s138, %s143
          %s145 = smul.addr %s15, 8
          %s146 = smul.addr %s145, 128
          %s147 = scalar_lea.hbm %s0, %s146
          %s148 = sshll.u32 %s141, 4
          %s149 = int_to_ptr.vmem [resolvable:$true] %s148
          %154 = dma.hbm_to_vmem [thread:$0]  %s147, 1024, %s149, %s138, 256, 256, 16
        $region28: #{tpu_custom_call.1} parent=23 // pred_fallthru
          _
      $region24: #{tpu_custom_call.1} parent=5 // pred_fallthru
        _
      %p155 = scmp.le.s32.totalorder 1, %s15
      %p156 = scmp.lt.s32.totalorder %s15, 3
      %p157 = pnand %p155, %p156
      %p158 = pneg %p157
      // Predicated region
      $region29: #{tpu_custom_call.1} parent=5 // pred_check
        _
      $region30: #{tpu_custom_call.1} parent=5 // pred_check_branch
        %160 = sbr.rel (%p157) target = $region32
      $region31: #{tpu_custom_call.1} parent=5 // pred_region
        %s161 = ssub.s32 %s15, 1
        %s162 = sand.u32 %s28, 1
        %s163 = scalar_lea.sflag [#allocation3], %s162
        %s164 = sand.u32 %s28, 1
        %s165 = smul.addr %s164, 64
        %s166 = scalar_lea.vmem [#allocation2], %s165
        // Predicated region
        $region33: #{tpu_custom_call.1} parent=31 // pred_check
          %p167 = pneg %p41
        $region34: #{tpu_custom_call.1} parent=31 // pred_check_branch
          %169 = sbr.rel (%p167) target = $region36
        $region35: #{tpu_custom_call.1} parent=31 // pred_region
          %170 = dma.done %s163, 1024
        $region36: #{tpu_custom_call.1} parent=31 // pred_fallthru
          _
        %s171 = sand.u32 %s28, 1
        %s172 = scalar_lea.sflag [#allocation3], %s171
        %s173 = sand.u32 %s28, 1
        %s174 = smul.addr %s173, 64
        %s175 = scalar_lea.vmem [#allocation2], %s174
        %p176 = pneg %p41
        %p177 = pneg %p38
        %p178 = pneg %p62
        %p179 = pneg %p59
        %p180 = pneg %p83
        %p181 = pneg %p80
        %p182 = pneg %p109
        %p183 = pneg %p106
        %s184 = sand.u32 %s96, 1
        %s185 = scalar_lea.sflag [#allocation4], %s184
        %s186 = sand.u32 %s96, 1
        %s187 = smul.addr %s186, 64
        %s188 = scalar_lea.vmem [#allocation5], %s187
        %v189 = vld [vmem:[%s166] sm:$0xff]
        %v190 = vld [vmem:[%s166 + $0x8] sm:$0xff]
        %v191 = vld [vmem:[%s166 + $0x10] sm:$0xff]
        %v192 = vld [vmem:[%s166 + $0x18] sm:$0xff]
        %v193 = vld [vmem:[%s166 + $0x20] sm:$0xff]
        %v194 = vld [vmem:[%s166 + $0x28] sm:$0xff]
        %v195 = vld [vmem:[%s166 + $0x30] sm:$0xff]
        %v196 = vld [vmem:[%s166 + $0x38] sm:$0xff]
        %v197 = vadd.f32 %v189, %v190
        %198 = vadd.xlane.f32.xlu0 %v197
        %v199 = vpop.xlane.xlu0 %198
        %v200 = vadd.f32 %v191, %v192
        %201 = vadd.xlane.f32.xlu0 %v200
        %v202 = vpop.xlane.xlu0 %201
        %v203 = vadd.f32 %v193, %v194
        %204 = vadd.xlane.f32.xlu0 %v203
        %v205 = vpop.xlane.xlu0 %204
        %v206 = vadd.f32 %v195, %v196
        %207 = vadd.xlane.f32.xlu0 %v206
        %v208 = vpop.xlane.xlu0 %207
        %v209 = vld [vmem:[%s1] sm:$0xff]
        %v210 = vld [vmem:[%s1 + $0x8] sm:$0xff]
        %v211 = vld [vmem:[%s1 + $0x10] sm:$0xff]
        %v212 = vld [vmem:[%s1 + $0x18] sm:$0xff]
        %v217 = vlaneseq
        %v218 = vand.u32 %v217, 127
        %v219 = vlaneseq
        %v220 = vshrl.u32 %v219, 7
        %v221 = vsub.s32 %v218, %v220
        %v222 = vrot.slane %v199, %v221
        %v223 = vadd.s32 %v218, 4294967288
        %v224 = vlaneseq
        %v225 = vshrl.u32 %v224, 7
        %v226 = vsub.s32 %v223, %v225
        %v227 = vrot.slane %v202, %v226
        %vm228 = vcmask 130112
        %v229 = vsel %vm228, %v227, %v222
        %v230 = vadd.s32 %v218, 4294967280
        %v231 = vlaneseq
        %v232 = vshrl.u32 %v231, 7
        %v233 = vsub.s32 %v230, %v232
        %v234 = vrot.slane %v205, %v233
        %vm235 = vcmask 195712
        %v236 = vsel %vm235, %v234, %v229
        %v237 = vadd.s32 %v218, 4294967272
        %v238 = vlaneseq
        %v239 = vshrl.u32 %v238, 7
        %v240 = vsub.s32 %v237, %v239
        %v241 = vrot.slane %v208, %v240
        %vm242 = vcmask 261312
        %v243 = vsel %vm242, %v241, %v236
        %vm244 = vcmask 261120
        %v245 = vsel %vm244, %v243, 0
        %247 = vmatprep.subr.mxu0 0.0
        %248 = vmatpush1.msra.mxu0 %v209
        %249 = vmatprep.subr.mxu0 0.0
        %250 = vmatpush1.msra.mxu0 %v210
        %251 = vmatprep.subr.mxu0 0.0
        %252 = vmatpush1.msra.mxu0 %v211
        %253 = vmatprep.subr.mxu0 0.0
        %254 = vmatpush1.msra.mxu0 %v212
        %255 = vmatprep.subr.mxu0 0.0
        %256 = vmatpush1.msra.mxu0 0.0
        %257 = vmatprep.subr.mxu0 0.0
        %258 = vmatpush1.msra.mxu0 0.0
        %259 = vmatprep.subr.mxu0 0.0
        %260 = vmatpush1.msra.mxu0 0.0
        %261 = vmatprep.subr.mxu0 0.0
        %262 = vmatpush1.msra.mxu0 0.0
        %263 = vmatprep.subr.mxu0 0.0
        %264 = vmatpush1.msra.mxu0 0.0
        %265 = vmatprep.subr.mxu0 0.0
        %266 = vmatpush1.msra.mxu0 0.0
        %267 = vmatprep.subr.mxu0 0.0
        %268 = vmatpush1.msra.mxu0 0.0
        %269 = vmatprep.subr.mxu0 0.0
        %270 = vmatpush1.msra.mxu0 0.0
        %271 = vmatprep.subr.mxu0 0.0
        %272 = vmatpush1.msra.mxu0 0.0
        %273 = vmatprep.subr.mxu0 0.0
        %274 = vmatpush1.msra.mxu0 0.0
        %275 = vmatprep.subr.mxu0 0.0
        %276 = vmatpush1.msra.mxu0 0.0
        %277 = vmatprep.subr.mxu0 0.0
        %278 = vmatpush1.msra.mxu0 0.0
        %279 = vmatprep.subr.mxu0 0.0
        %280 = vmatpush1.msra.mxu0 0.0
        %281 = vmatprep.subr.mxu0 0.0
        %282 = vmatpush1.msra.mxu0 0.0
        %283 = vmatprep.subr.mxu0 0.0
        %284 = vmatpush1.msra.mxu0 0.0
        %285 = vmatprep.subr.mxu0 0.0
        %286 = vmatpush1.msra.mxu0 0.0
        %287 = vmatprep.subr.mxu0 0.0
        %288 = vmatpush1.msra.mxu0 0.0
        %289 = vmatprep.subr.mxu0 0.0
        %290 = vmatpush1.msra.mxu0 0.0
        %291 = vmatprep.subr.mxu0 0.0
        %292 = vmatpush1.msra.mxu0 0.0
        %293 = vmatprep.subr.mxu0 0.0
        %294 = vmatpush1.msra.mxu0 0.0
        %295 = vmatprep.subr.mxu0 0.0
        %296 = vmatpush1.msra.mxu0 0.0
        %297 = vmatprep.subr.mxu0 0.0
        %298 = vmatpush1.msra.mxu0 0.0
        %299 = vmatprep.subr.mxu0 0.0
        %300 = vmatpush1.msra.mxu0 0.0
        %301 = vmatprep.subr.mxu0 0.0
        %302 = vmatpush1.msra.mxu0 0.0
        %303 = vmatprep.subr.mxu0 0.0
        %304 = vmatpush1.msra.mxu0 0.0
        %305 = vmatprep.subr.mxu0 0.0
        %306 = vmatpush1.msra.mxu0 0.0
        %307 = vmatprep.subr.mxu0 0.0
        %308 = vmatpush1.msra.mxu0 0.0
        %309 = vmatprep.subr.mxu0 0.0
        %310 = vmatpush1.msra.mxu0 0.0
        %311 = vmatprep.mubr.f32.mxu0 0.0
        %312 = vmatmul.mubr.f32.gmra.mrb[0].mxu0 %v245
        %v313 = vpop.f32.mrb[0].mxu0
        %v314 = vadd.f32 0.0, %v313
        %v315 = vpop.f32.mrb[0].mxu0
        %316 = vdwg.mxu0
        %v317 = vmax.f32 %v314, 0.0
        %v318 = vld [vmem:[%s2] sm:$0xff]
        %vm319 = vcmask 64512
        %v321 = vsel %vm319, %v317, 0
        %323 = vmatprep.subr.mxu0 0.0
        %324 = vmatpush1.msra.mxu0 %v318
        %325 = vmatprep.subr.mxu0 0.0
        %326 = vmatpush1.msra.mxu0 0.0
        %327 = vmatprep.subr.mxu0 0.0
        %328 = vmatpush1.msra.mxu0 0.0
        %329 = vmatprep.subr.mxu0 0.0
        %330 = vmatpush1.msra.mxu0 0.0
        %331 = vmatprep.subr.mxu0 0.0
        %332 = vmatpush1.msra.mxu0 0.0
        %333 = vmatprep.subr.mxu0 0.0
        %334 = vmatpush1.msra.mxu0 0.0
        %335 = vmatprep.subr.mxu0 0.0
        %336 = vmatpush1.msra.mxu0 0.0
        %337 = vmatprep.subr.mxu0 0.0
        %338 = vmatpush1.msra.mxu0 0.0
        %339 = vmatprep.subr.mxu0 0.0
        %340 = vmatpush1.msra.mxu0 0.0
        %341 = vmatprep.subr.mxu0 0.0
        %342 = vmatpush1.msra.mxu0 0.0
        %343 = vmatprep.subr.mxu0 0.0
        %344 = vmatpush1.msra.mxu0 0.0
        %345 = vmatprep.subr.mxu0 0.0
        %346 = vmatpush1.msra.mxu0 0.0
        %347 = vmatprep.subr.mxu0 0.0
        %348 = vmatpush1.msra.mxu0 0.0
        %349 = vmatprep.subr.mxu0 0.0
        %350 = vmatpush1.msra.mxu0 0.0
        %351 = vmatprep.subr.mxu0 0.0
        %352 = vmatpush1.msra.mxu0 0.0
        %353 = vmatprep.subr.mxu0 0.0
        %354 = vmatpush1.msra.mxu0 0.0
        %355 = vmatprep.subr.mxu0 0.0
        %356 = vmatpush1.msra.mxu0 0.0
        %357 = vmatprep.subr.mxu0 0.0
        %358 = vmatpush1.msra.mxu0 0.0
        %359 = vmatprep.subr.mxu0 0.0
        %360 = vmatpush1.msra.mxu0 0.0
        %361 = vmatprep.subr.mxu0 0.0
        %362 = vmatpush1.msra.mxu0 0.0
        %363 = vmatprep.subr.mxu0 0.0
        %364 = vmatpush1.msra.mxu0 0.0
        %365 = vmatprep.subr.mxu0 0.0
        %366 = vmatpush1.msra.mxu0 0.0
        %367 = vmatprep.subr.mxu0 0.0
        %368 = vmatpush1.msra.mxu0 0.0
        %369 = vmatprep.subr.mxu0 0.0
        %370 = vmatpush1.msra.mxu0 0.0
        %371 = vmatprep.subr.mxu0 0.0
        %372 = vmatpush1.msra.mxu0 0.0
        %373 = vmatprep.subr.mxu0 0.0
        %374 = vmatpush1.msra.mxu0 0.0
        %375 = vmatprep.subr.mxu0 0.0
        %376 = vmatpush1.msra.mxu0 0.0
        %377 = vmatprep.subr.mxu0 0.0
        %378 = vmatpush1.msra.mxu0 0.0
        %379 = vmatprep.subr.mxu0 0.0
        %380 = vmatpush1.msra.mxu0 0.0
        %381 = vmatprep.subr.mxu0 0.0
        %382 = vmatpush1.msra.mxu0 0.0
        %383 = vmatprep.subr.mxu0 0.0
        %384 = vmatpush1.msra.mxu0 0.0
        %385 = vmatprep.subr.mxu0 0.0
        %386 = vmatpush1.msra.mxu0 0.0
        %387 = vmatprep.mubr.f32.mxu0 0.0
        %388 = vmatmul.mubr.f32.gmra.mrb[0].mxu0 %v321
        %v389 = vpop.f32.mrb[0].mxu0
        %v390 = vadd.f32 0.0, %v389
        %v391 = vpop.f32.mrb[0].mxu0
        %392 = vdwg.mxu0
        %v393 = vxor.u32 %v390, 2147483648
        %v394 = vmul.f32 %v393, 1.442695
        %v395 = vpow.pop %v394
        %v396 = vadd.f32 %v395, 1.0
        %v397 = vrcp.pop %v396
        %v398 = vmul.f32 1.0, %v397
        %v399 = vlaneseq
        %v400 = vshrl.u32 %v399, 7
        %v401 = vsub.s32 0, %v400
        %v402 = vrot.slane %v398, %v401
        %404 = vbcast.lane.b32.xlu0 %v402, 256
        %v405 = vpop.permute.xlu0 %404
        %s407 = sor.u32 256, 8
        %408 = vbcast.lane.b32.xlu0 %v402, %s407
        %v409 = vpop.permute.xlu0 %408
        %s411 = sor.u32 256, 16
        %412 = vbcast.lane.b32.xlu0 %v402, %s411
        %v413 = vpop.permute.xlu0 %412
        %s415 = sor.u32 256, 24
        %416 = vbcast.lane.b32.xlu0 %v402, %s415
        %v417 = vpop.permute.xlu0 %416
        %v418 = vmul.f32 %v189, %v405
        %v419 = vmul.f32 %v190, %v405
        %v420 = vmul.f32 %v191, %v409
        %v421 = vmul.f32 %v192, %v409
        %v422 = vmul.f32 %v193, %v413
        %v423 = vmul.f32 %v194, %v413
        %v424 = vmul.f32 %v195, %v417
        %v425 = vmul.f32 %v196, %v417
        %426 = vst [vmem:[%s188] sm:$0xff] %v418
        %427 = vst [vmem:[%s188 + $0x8] sm:$0xff] %v419
        %428 = vst [vmem:[%s188 + $0x10] sm:$0xff] %v420
        %429 = vst [vmem:[%s188 + $0x18] sm:$0xff] %v421
        %430 = vst [vmem:[%s188 + $0x20] sm:$0xff] %v422
        %431 = vst [vmem:[%s188 + $0x28] sm:$0xff] %v423
        %432 = vst [vmem:[%s188 + $0x30] sm:$0xff] %v424
        %433 = vst [vmem:[%s188 + $0x38] sm:$0xff] %v425
        %s434 = sand.u32 %s96, 1
        %s435 = scalar_lea.sflag [#allocation4], %s434
        %s436 = sand.u32 %s96, 1
        %s437 = smul.addr %s436, 64
        %s438 = scalar_lea.vmem [#allocation5], %s437
        // Predicated region
        $region37: #{tpu_custom_call.1} parent=31 // pred_check
          %p439 = pneg %p106
        $region38: #{tpu_custom_call.1} parent=31 // pred_check_branch
          %441 = sbr.rel (%p439) target = $region40
        $region39: #{tpu_custom_call.1} parent=31 // pred_region
          %s443 = ssub.s32 1024, 1024
          %444 = vsyncadd %s435, %s443
          %s445 = smul.addr %s20, 8
          %s446 = smul.addr %s445, 128
          %s447 = scalar_lea.hbm %s3, %s446
          %s448 = sshll.u32 %s438, 4
          %s449 = int_to_ptr.vmem [resolvable:$true] %s448
          %454 = dma.vmem_to_hbm [thread:$0]  %s449, 1024, %s447, %s435, 256, 256, 16
        $region40: #{tpu_custom_call.1} parent=31 // pred_fallthru
          _
      $region32: #{tpu_custom_call.1} parent=5 // pred_fallthru
        _
      %p455 = scmp.le.s32.totalorder 2, %s15
      // Predicated region
      $region41: #{tpu_custom_call.1} parent=5 // pred_check
        %p456 = pneg %p455
      $region42: #{tpu_custom_call.1} parent=5 // pred_check_branch
        %458 = sbr.rel (%p456) target = $region44
      $region43: #{tpu_custom_call.1} parent=5 // pred_region
        %s459 = ssub.s32 %s15, 2
        // Predicated region
        $region45: #{tpu_custom_call.1} parent=43 // pred_check
          %p460 = pneg %p112
        $region46: #{tpu_custom_call.1} parent=43 // pred_check_branch
          %462 = sbr.rel (%p460) target = $region48
        $region47: #{tpu_custom_call.1} parent=43 // pred_region
          %s463 = sand.u32 %s97, 1
          %s464 = scalar_lea.sflag [#allocation4], %s463
          %s465 = sand.u32 %s97, 1
          %s466 = smul.addr %s465, 64
          %s467 = scalar_lea.vmem [#allocation5], %s466
          %468 = dma.done %s464, 1024
        $region48: #{tpu_custom_call.1} parent=43 // pred_fallthru
          _
      $region44: #{tpu_custom_call.1} parent=5 // pred_fallthru
        _
    $region6: #{tpu_custom_call.1} parent=1 // loop_footer
      %s19 = sadd.s32 1, %s15
    $region7: #{tpu_custom_call.1} parent=1 // loop_footer_branch
      %14 = sbr.rel target = $region3
    $region8: #{tpu_custom_call.1} parent=1 // loop_exit
      _
    %469 = vsyncpa [#allocation3], 1
    %s470 = scalar_lea.sflag [#allocation3], 1
    %471 = vsyncpa %s470, 1
    %472 = vsyncpa [#allocation4], 1
    %s473 = scalar_lea.sflag [#allocation4], 1
    %474 = vsyncpa %s473, 1

</llo_original>
